<compile_context>
chip_gen: v7x
topology: tpu7x:2x2x1
jax: 0.10.0
libtpu: 0.0.40
codegen_flags: <defaults>
</compile_context>

<pallas_src>
import functools

import numpy as np
import jax
import jax.numpy as jnp
from jax.experimental import pallas as pl
from jax.experimental.pallas import tpu as pltpu


KSIZE = 11
SIGMA = 1.5
LANE_BLK = 256  # output-column block: multiple of 128 -> unmasked stores; >1 block -> v7x megacore


# ----------------------------- gaussian window helpers -----------------------------

def fspecial_gauss_np(size, sigma):
    """2-D window exactly as the PyTorch fspecial_gauss (normalized to sum to 1)."""
    x, y = np.mgrid[-size // 2 + 1:size // 2 + 1, -size // 2 + 1:size // 2 + 1]
    g = np.exp(-((x ** 2 + y ** 2) / (2.0 * sigma ** 2)))
    return (g / g.sum()).astype(np.float32)


def gauss_taps_1d_np(size, sigma):
    """1-D taps v such that outer(v, v) == fspecial_gauss(size, sigma)."""
    x = np.arange(-size // 2 + 1, size // 2 + 1, dtype=np.float64)
    e = np.exp(-(x ** 2) / (2.0 * sigma ** 2))
    return e / e.sum()


def banded_np(n_in, taps):
    """(n_in, n_out) matrix M with M[o + j, o] = taps[j]  (VALID 1-D correlation)."""
    k = len(taps)
    n_out = n_in - k + 1
    m = np.zeros((n_in, n_out), np.float64)
    idx = np.arange(n_out)
    for j in range(k):
        m[idx + j, idx] = taps[j]
    return m


def build_window_matrix_np(h, w, size, sigma, lane_blk=LANE_BLK):
    """(h*w, padded_cols) f32 matrix: column p*ow+q holds the 11x11 gaussian window
    anchored at output pixel (p, q); trailing columns are zero padding (lane density)."""
    v = gauss_taps_1d_np(size, sigma)
    bv = banded_np(h, v)                       # (h, oh)
    bh = banded_np(w, v)                       # (w, ow)
    w2d = np.kron(bv, bh)                      # (h*w, oh*ow), exact separable window
    n_cols = w2d.shape[1]
    padded = ((n_cols + lane_blk - 1) // lane_blk) * lane_blk
    w2d = np.pad(w2d, ((0, 0), (0, padded - n_cols)))
    return w2d.astype(np.float32), n_cols


# ----------------------------------- Pallas kernel ----------------------------------

def _contrast_kernel(x_ref, w_ref, o_ref, *, bc):
    # x_ref : (bc, h*w)        input maps, whole array resident        (VMEM)
    # w_ref : (h*w, LANE_BLK)  block of the banded gaussian window     (VMEM)
    # o_ref : (bc, LANE_BLK)   block of the local-variance map (lane-dense)
    x = x_ref[...]
    t = jnp.concatenate([x, x * x], axis=0)          # (2*bc, h*w): fused mu / E[x^2] pass
    r = jnp.dot(t, w_ref[...],
                preferred_element_type=jnp.float32)  # single lane-dense MXU matmul
    mu = r[:bc]
    ex2 = r[bc:]
    o_ref[...] = ex2 - mu * mu


def contrast_extracter_forward(x, w2d_padded):
    """x: (B, C, H, W) float32 -> contrast map (B, C, H-10, W-10) float32."""
    b, c, h, w = x.shape
    oh, ow = h - KSIZE + 1, w - KSIZE + 1
    n_valid = oh * ow
    bc = b * c
    hw = h * w
    padded_cols = w2d_padded.shape[1]
    assert padded_cols % LANE_BLK == 0 and padded_cols >= n_valid

    out = pl.pallas_call(
        functools.partial(_contrast_kernel, bc=bc),
        out_shape=jax.ShapeDtypeStruct((bc, padded_cols), jnp.float32),
        grid_spec=pltpu.PrefetchScalarGridSpec(
            num_scalar_prefetch=0,
            grid=(padded_cols // LANE_BLK,),
            in_specs=[
                pl.BlockSpec((bc, hw), lambda j: (0, 0)),        # whole input, resident
                pl.BlockSpec((hw, LANE_BLK), lambda j: (0, j)),  # window-matrix column block
            ],
            out_specs=pl.BlockSpec((bc, LANE_BLK), lambda j: (0, j)),
        ),
        compiler_params=pltpu.CompilerParams(
            dimension_semantics=("parallel",)),                  # shards across v7x TCs
    )(x.reshape(bc, hw), w2d_padded)

    return out[:, :n_valid].reshape(b, c, oh, ow)


# ------------------------------ reference (numpy, float64) ---------------------------

def ref_contrast_np(x_np, win_np):
    """Direct 121-tap local variance in float64 (mirrors compute_contrast exactly)."""
    b, c, h, w = x_np.shape
    k = win_np.shape[0]
    oh, ow = h - k + 1, w - k + 1
    xd = x_np.astype(np.float64)
    wd = win_np.astype(np.float64)
    mu = np.zeros((b, c, oh, ow), np.float64)
    ex2 = np.zeros((b, c, oh, ow), np.float64)
    for i in range(k):
        for j in range(k):
            patch = xd[:, :, i:i + oh, j:j + ow]
            mu += wd[i, j] * patch
            ex2 += wd[i, j] * (patch * patch)
    return ex2 - mu * mu


# ----------------------------------------- main --------------------------------------

if __name__ == "__main__":
    B, C, H, W = 2, 4, 32, 32

    key = jax.random.PRNGKey(0)
    x = jax.random.normal(key, (B, C, H, W), jnp.float32)

    w2d_np, n_cols = build_window_matrix_np(H, W, KSIZE, SIGMA)
    w2d = jnp.asarray(w2d_np)

    fwd = jax.jit(contrast_extracter_forward)
    contrast_map = fwd(x, w2d)
    jax.block_until_ready(contrast_map)

    OH, OW = H - KSIZE + 1, W - KSIZE + 1
    assert contrast_map.shape == (B, C, OH, OW)
    assert n_cols == OH * OW

    # sanity: the module's 2-D window is exactly the outer product of the 1-D taps
    v = gauss_taps_1d_np(KSIZE, SIGMA)
    win2d = fspecial_gauss_np(KSIZE, SIGMA)
    np.testing.assert_allclose(np.outer(v, v), win2d, atol=1e-6, rtol=1e-5)

    ref = ref_contrast_np(np.asarray(x), win2d)
    np.testing.assert_allclose(np.asarray(contrast_map), ref, atol=1e-2, rtol=1e-2)

    print("KERNEL_OK")
</pallas_src>

<mosaic_0001>
module attributes {stable_mosaic.version = 11 : i64} {
  func.func @_contrast_kernel(%arg0: i32, %arg1: memref<8x1024xf32, #tpu.memory_space<vmem>>, %arg2: memref<1024x256xf32, #tpu.memory_space<vmem>>, %arg3: memref<8x256xf32, #tpu.memory_space<vmem>>) attributes {dimension_semantics = [#tpu.dimension_semantics<parallel>], iteration_bounds = array<i64: 2>, scalar_prefetch = 0 : i64, scratch_operands = 0 : i64, tpu.core_type = #tpu.core_type<tc>, window_params = [{pipeline_mode = #tpu.pipeline_mode<synchronous>, transform_indices = @transform_0, window_bounds = array<i64: 8, 1024>}, {transform_indices = @transform_1, window_bounds = array<i64: 1024, 256>}, {transform_indices = @transform_2, window_bounds = array<i64: 8, 256>}]} {
    %c0 = arith.constant 0 : index
    %c0_0 = arith.constant 0 : index
    %0 = vector.load %arg1[%c0, %c0_0] : memref<8x1024xf32, #tpu.memory_space<vmem>>, vector<8x1024xf32>
    %1 = arith.mulf %0, %0 : vector<8x1024xf32>
    %2 = tpu.concatenate %0, %1 in 0 : vector<8x1024xf32>, vector<8x1024xf32> -> vector<16x1024xf32>
    %c0_1 = arith.constant 0 : index
    %c0_2 = arith.constant 0 : index
    %3 = vector.load %arg2[%c0_1, %c0_2] : memref<1024x256xf32, #tpu.memory_space<vmem>>, vector<1024x256xf32>
    %cst = arith.constant dense<0.000000e+00> : vector<16x256xf32>
    %4 = tpu.matmul %2, %3, %cst {dimension_numbers = #tpu.dot_dimension_numbers<[1], [0], [0], [1], [0, 0, 1, 1], [], []>} : vector<16x1024xf32>, vector<1024x256xf32>, vector<16x256xf32> -> vector<16x256xf32>
    %5 = vector.extract_strided_slice %4 {offsets = [0, 0], sizes = [8, 256], strides = [1, 1]} : vector<16x256xf32> to vector<8x256xf32>
    %6 = vector.extract_strided_slice %4 {offsets = [8, 0], sizes = [8, 256], strides = [1, 1]} : vector<16x256xf32> to vector<8x256xf32>
    %7 = arith.mulf %5, %5 : vector<8x256xf32>
    %8 = arith.subf %6, %7 : vector<8x256xf32>
    %c0_3 = arith.constant 0 : index
    %c0_4 = arith.constant 0 : index
    %9 = vector.load %arg3[%c0_3, %c0_4] : memref<8x256xf32, #tpu.memory_space<vmem>>, vector<8x256xf32>
    tpu.vector_store %arg3[%c0_3, %c0_4], %8 {strides = array<i32>} : memref<8x256xf32, #tpu.memory_space<vmem>>, vector<8x256xf32>,
    return
  }
  func.func @transform_0(%arg0: i32) -> (i32, i32) {
    %c0_i32 = arith.constant 0 : i32
    %c0_i32_0 = arith.constant 0 : i32
    %c0_i32_1 = arith.constant 0 : i32
    return %c0_i32, %c0_i32_0 : i32, i32
  }
  func.func @transform_1(%arg0: i32) -> (i32, i32) {
    %c0_i32 = arith.constant 0 : i32
    %c0_i32_0 = arith.constant 0 : i32
    return %c0_i32, %arg0 : i32, i32
  }
  func.func @transform_2(%arg0: i32) -> (i32, i32) {
    %c0_i32 = arith.constant 0 : i32
    %c0_i32_0 = arith.constant 0 : i32
    return %c0_i32, %arg0 : i32, i32
  }
}

</mosaic_0001>

<llo_original>
// kernel: contrast_extracter_forward.1
$region0: #{contrast_extracter_forward.1}
  #allocation0 [shape = 'u32[]', space=smem, size = 0x4, offset = 0x4, fixed_abs, tag = 'smem constant byte address 0x4 - core index']
  #allocation1 [shape = 'u32[144,128]{1,0:T(1,128)}', space=vmem, size = 0x12000, scoped, tag = 'internal scratch']
  %s0 = inlined_call_operand.vmem [shape: f32[8,1024], index: 0, kind: input, shape index: {}]
  %s1 = inlined_call_operand.hbm [shape: f32[1024,512], index: 1, kind: input, shape index: {}]
  %s2 = inlined_call_operand.vmem [shape: f32[8,512], index: 2, kind: output, shape index: {}]
  %s3 = sld [smem:[#allocation0]]
  $region45: #{contrast_extracter_forward.1} parent=0
    _
  %s5 = ssub.s32 1, %s3
  %s6 = scalar_select 0, %s5, %s3
  $region1: #{contrast_extracter_forward.1} parent=0
    #allocation2 [shape = 'u8[2097152]{0}', space=vmem, size = 0x200000, scoped, tag = 'input window, operand 1']
    #allocation3 [shape = 's32[2]{0}', space=sflag, size = 0x8, scoped, tag = 'scoped memory for contrast_extracter_forward.1']
    %7 = vsyncpa [#allocation3], 0
    %s8 = scalar_lea.sflag [#allocation3], 1
    %9 = vsyncpa %s8, 0
    loop: start=0, step=1, limit=4
    $region2: #{contrast_extracter_forward.1} parent=1 // loop_pre_header
      _
    $region3: #{contrast_extracter_forward.1} parent=1 // loop_header
      %s11 = sphi 0, %s15
      %p12 = scmp.ge.s32.totalorder %s11, 4
      %s19 = sphi 0, %s19
      %s21 = sphi 0, %s19
      %s22 = sphi 0, %s21
      %s36 = sphi 0, %s22
      %s42 = sphi 0, %s44
      %s45 = sphi 0, %s42
      %s46 = sphi 0, %s45
      %s62 = sphi 0, %s46
      %s68 = sphi 0, %s70
      %s71 = sphi 0, %s68
      %s72 = sphi 0, %s71
      %s88 = sphi 0, %s72
    $region4: #{contrast_extracter_forward.1} parent=1 // loop_header_branch
      %14 = sbr.rel (%p12) target = $region8
    $region5: #{contrast_extracter_forward.1} parent=1 // loop_body
      %s16 = ssub.s32 %s11, 1
      %s17 = ssub.s32 %s11, 2
      %s18 = sadd.s32 %s11, 1
      %s20 = sadd.s32 %s19, 1
      %p23 = scmp.eq.s32.totalorder %s11, 1
      %p24 = scmp.ne.s32.totalorder %s19, %s21
      %p25 = scmp.eq.s32.totalorder %s11, 0
      %p26 = por %p24, %p25
      %p27 = scmp.ne.s32.totalorder %s19, %s21
      %p28 = scmp.eq.s32.totalorder %s16, 1
      %p29 = por %p27, %p28
      %p30 = scmp.ne.s32.totalorder %s21, %s22
      %p31 = scmp.eq.s32.totalorder %s16, 0
      %p32 = por %p30, %p31
      %p33 = scmp.ne.s32.totalorder %s21, %s22
      %p34 = scmp.eq.s32.totalorder %s17, 1
      %p35 = por %p33, %p34
      %p37 = scmp.ne.s32.totalorder %s22, %s36
      %p38 = scmp.eq.s32.totalorder %s17, 0
      %p39 = por %p37, %p38
      %s40 = ssub.s32 %s11, %s18
      %p41 = scmp.eq.s32.totalorder %s40, 0
      %s43 = sadd.s32 %s42, 1
      %s44 = scalar_select %p41, %s42, %s43
      %p47 = pneg %p41
      %p48 = scmp.eq.s32.totalorder %s11, 1
      %p49 = por %p47, %p48
      %p50 = scmp.ne.s32.totalorder %s42, %s45
      %p51 = scmp.eq.s32.totalorder %s11, 0
      %p52 = por %p50, %p51
      %p53 = scmp.ne.s32.totalorder %s42, %s45
      %p54 = scmp.eq.s32.totalorder %s16, 1
      %p55 = por %p53, %p54
      %p56 = scmp.ne.s32.totalorder %s45, %s46
      %p57 = scmp.eq.s32.totalorder %s16, 0
      %p58 = por %p56, %p57
      %p59 = scmp.ne.s32.totalorder %s45, %s46
      %p60 = scmp.eq.s32.totalorder %s17, 1
      %p61 = por %p59, %p60
      %p63 = scmp.ne.s32.totalorder %s46, %s62
      %p64 = scmp.eq.s32.totalorder %s17, 0
      %p65 = por %p63, %p64
      %s66 = ssub.s32 %s11, %s18
      %p67 = scmp.eq.s32.totalorder %s66, 0
      %s69 = sadd.s32 %s68, 1
      %s70 = scalar_select %p67, %s68, %s69
      %p73 = pneg %p67
      %p74 = scmp.eq.s32.totalorder %s11, 1
      %p75 = por %p73, %p74
      %p76 = scmp.ne.s32.totalorder %s68, %s71
      %p77 = scmp.eq.s32.totalorder %s11, 0
      %p78 = por %p76, %p77
      %p79 = scmp.ne.s32.totalorder %s68, %s71
      %p80 = scmp.eq.s32.totalorder %s16, 1
      %p81 = por %p79, %p80
      %p82 = scmp.ne.s32.totalorder %s71, %s72
      %p83 = scmp.eq.s32.totalorder %s16, 0
      %p84 = por %p82, %p83
      %p85 = scmp.ne.s32.totalorder %s71, %s72
      %p86 = scmp.eq.s32.totalorder %s17, 1
      %p87 = por %p85, %p86
      %p89 = scmp.ne.s32.totalorder %s72, %s88
      %p90 = scmp.eq.s32.totalorder %s17, 0
      %p91 = por %p89, %p90
      %p92 = scmp.le.s32.totalorder 1, %s11
      %p93 = scmp.lt.s32.totalorder %s11, 3
      %p94 = pnand %p92, %p93
      %p95 = pneg %p94
      // Predicated region
      $region9: #{contrast_extracter_forward.1} parent=5 // pred_check
        _
      $region10: #{contrast_extracter_forward.1} parent=5 // pred_check_branch
        %97 = sbr.rel (%p94) target = $region12
      $region11: #{contrast_extracter_forward.1} parent=5 // pred_region
        %s98 = ssub.s32 %s11, 1
        // Predicated region
        $region13: #{contrast_extracter_forward.1} parent=11 // pred_check
          %p99 = pneg %p32
        $region14: #{contrast_extracter_forward.1} parent=11 // pred_check_branch
          %101 = sbr.rel (%p99) target = $region16
        $region15: #{contrast_extracter_forward.1} parent=11 // pred_region
          _
        $region16: #{contrast_extracter_forward.1} parent=11 // pred_fallthru
          _
      $region12: #{contrast_extracter_forward.1} parent=5 // pred_fallthru
        _
      %p102 = scmp.lt.s32.totalorder %s11, 2
      // Predicated region
      $region17: #{contrast_extracter_forward.1} parent=5 // pred_check
        %p103 = pneg %p102
      $region18: #{contrast_extracter_forward.1} parent=5 // pred_check_branch
        %105 = sbr.rel (%p103) target = $region20
      $region19: #{contrast_extracter_forward.1} parent=5 // pred_region
        // Predicated region
        $region21: #{contrast_extracter_forward.1} parent=19 // pred_check
          %p106 = pneg %p52
        $region22: #{contrast_extracter_forward.1} parent=19 // pred_check_branch
          %108 = sbr.rel (%p106) target = $region24
        $region23: #{contrast_extracter_forward.1} parent=19 // pred_region
          %s109 = sand.u32 %s42, 1
          %s110 = scalar_lea.sflag [#allocation3], %s109
          %s111 = sand.u32 %s42, 1
          %s112 = smul.addr %s111, 2048
          %s113 = scalar_lea.vmem [#allocation2], %s112
          %s114 = smul.u32 2, %s11
          %s116 = ssub.s32 32768, 32768
          %117 = vsyncadd %s110, %s116
          %s118 = smul.addr %s114, 128
          %s119 = scalar_lea.hbm %s1, %s118
          %s120 = sshll.u32 %s113, 4
          %s121 = int_to_ptr.vmem [resolvable:$true] %s120
          %126 = dma.hbm_to_vmem [thread:$0]  %s119, 32768, %s121, %s110, 512, 256, 16
        $region24: #{contrast_extracter_forward.1} parent=19 // pred_fallthru
          _
      $region20: #{contrast_extracter_forward.1} parent=5 // pred_fallthru
        _
      %p127 = scmp.le.s32.totalorder 1, %s11
      %p128 = scmp.lt.s32.totalorder %s11, 3
      %p129 = pnand %p127, %p128
      %p130 = pneg %p129
      // Predicated region
      $region25: #{contrast_extracter_forward.1} parent=5 // pred_check
        _
      $region26: #{contrast_extracter_forward.1} parent=5 // pred_check_branch
        %132 = sbr.rel (%p129) target = $region28
      $region27: #{contrast_extracter_forward.1} parent=5 // pred_region
        %s133 = ssub.s32 %s11, 1
        %s134 = sand.u32 %s45, 1
        %s135 = scalar_lea.sflag [#allocation3], %s134
        %s136 = sand.u32 %s45, 1
        %s137 = smul.addr %s136, 2048
        %s138 = scalar_lea.vmem [#allocation2], %s137
        // Predicated region
        $region29: #{contrast_extracter_forward.1} parent=27 // pred_check
          %p139 = pneg %p58
        $region30: #{contrast_extracter_forward.1} parent=27 // pred_check_branch
          %141 = sbr.rel (%p139) target = $region32
        $region31: #{contrast_extracter_forward.1} parent=27 // pred_region
          %142 = dma.done %s135, 32768
        $region32: #{contrast_extracter_forward.1} parent=27 // pred_fallthru
          _
        %p143 = pneg %p32
        %p144 = pneg %p29
        %s145 = sand.u32 %s45, 1
        %s146 = scalar_lea.sflag [#allocation3], %s145
        %s147 = sand.u32 %s45, 1
        %s148 = smul.addr %s147, 2048
        %s149 = scalar_lea.vmem [#allocation2], %s148
        %p150 = pneg %p58
        %p151 = pneg %p55
        %p152 = pneg %p84
        %p153 = pneg %p81
        %s154 = smul.u32 2, %s16
        %p155 = scmp.lt.s32.totalorder %s154, 3
        %s156 = scalar_select %p155, %s154, 3
        %s157 = smul.addr %s156, 8
        %s158 = scalar_lea.vmem %s2, %s157
        %s159 = smul.u32 2, %s16
        %s160 = smul.u32 2, %s16
        %p161 = scmp.lt.s32.totalorder %s160, 3
        %s162 = scalar_select %p161, %s160, 3
        %s163 = smul.addr %s162, 8
        %s164 = scalar_lea.vmem %s2, %s163
        %s165 = smul.u32 2, %s16
        %v166 = vld [vmem:[%s0] sm:$0xff]
        %v167 = vld [vmem:[%s0 + $0x8] sm:$0xff]
        %v168 = vld [vmem:[%s0 + $0x10] sm:$0xff]
        %v169 = vld [vmem:[%s0 + $0x18] sm:$0xff]
        %v170 = vld [vmem:[%s0 + $0x20] sm:$0xff]
        %v171 = vld [vmem:[%s0 + $0x28] sm:$0xff]
        %v172 = vld [vmem:[%s0 + $0x30] sm:$0xff]
        %v173 = vld [vmem:[%s0 + $0x38] sm:$0xff]
        %v174 = vmul.f32 %v166, %v166
        %v175 = vmul.f32 %v167, %v167
        %v176 = vmul.f32 %v168, %v168
        %v177 = vmul.f32 %v169, %v169
        %v178 = vmul.f32 %v170, %v170
        %v179 = vmul.f32 %v171, %v171
        %v180 = vmul.f32 %v172, %v172
        %v181 = vmul.f32 %v173, %v173
        %v182 = vld [vmem:[%s138] sm:$0xff]
        %v183 = vld [vmem:[%s138 + $0x8] sm:$0xff]
        %v184 = vld [vmem:[%s138 + $0x10] sm:$0xff]
        %v185 = vld [vmem:[%s138 + $0x18] sm:$0xff]
        %v186 = vld [vmem:[%s138 + $0x20] sm:$0xff]
        %v187 = vld [vmem:[%s138 + $0x28] sm:$0xff]
        %v188 = vld [vmem:[%s138 + $0x30] sm:$0xff]
        %v189 = vld [vmem:[%s138 + $0x38] sm:$0xff]
        %v190 = vld [vmem:[%s138 + $0x40] sm:$0xff]
        %v191 = vld [vmem:[%s138 + $0x48] sm:$0xff]
        %v192 = vld [vmem:[%s138 + $0x50] sm:$0xff]
        %v193 = vld [vmem:[%s138 + $0x58] sm:$0xff]
        %v194 = vld [vmem:[%s138 + $0x60] sm:$0xff]
        %v195 = vld [vmem:[%s138 + $0x68] sm:$0xff]
        %v196 = vld [vmem:[%s138 + $0x70] sm:$0xff]
        %v197 = vld [vmem:[%s138 + $0x78] sm:$0xff]
        %v198 = vld [vmem:[%s138 + $0x80] sm:$0xff]
        %v199 = vld [vmem:[%s138 + $0x88] sm:$0xff]
        %v200 = vld [vmem:[%s138 + $0x90] sm:$0xff]
        %v201 = vld [vmem:[%s138 + $0x98] sm:$0xff]
        %v202 = vld [vmem:[%s138 + $0xa0] sm:$0xff]
        %v203 = vld [vmem:[%s138 + $0xa8] sm:$0xff]
        %v204 = vld [vmem:[%s138 + $0xb0] sm:$0xff]
        %v205 = vld [vmem:[%s138 + $0xb8] sm:$0xff]
        %v206 = vld [vmem:[%s138 + $0xc0] sm:$0xff]
        %v207 = vld [vmem:[%s138 + $0xc8] sm:$0xff]
        %v208 = vld [vmem:[%s138 + $0xd0] sm:$0xff]
        %v209 = vld [vmem:[%s138 + $0xd8] sm:$0xff]
        %v210 = vld [vmem:[%s138 + $0xe0] sm:$0xff]
        %v211 = vld [vmem:[%s138 + $0xe8] sm:$0xff]
        %v212 = vld [vmem:[%s138 + $0xf0] sm:$0xff]
        %v213 = vld [vmem:[%s138 + $0xf8] sm:$0xff]
        %v214 = vld [vmem:[%s138 + $0x100] sm:$0xff]
        %v215 = vld [vmem:[%s138 + $0x108] sm:$0xff]
        %v216 = vld [vmem:[%s138 + $0x110] sm:$0xff]
        %v217 = vld [vmem:[%s138 + $0x118] sm:$0xff]
        %v218 = vld [vmem:[%s138 + $0x120] sm:$0xff]
        %v219 = vld [vmem:[%s138 + $0x128] sm:$0xff]
        %v220 = vld [vmem:[%s138 + $0x130] sm:$0xff]
        %v221 = vld [vmem:[%s138 + $0x138] sm:$0xff]
        %v222 = vld [vmem:[%s138 + $0x140] sm:$0xff]
        %v223 = vld [vmem:[%s138 + $0x148] sm:$0xff]
        %v224 = vld [vmem:[%s138 + $0x150] sm:$0xff]
        %v225 = vld [vmem:[%s138 + $0x158] sm:$0xff]
        %v226 = vld [vmem:[%s138 + $0x160] sm:$0xff]
        %v227 = vld [vmem:[%s138 + $0x168] sm:$0xff]
        %v228 = vld [vmem:[%s138 + $0x170] sm:$0xff]
        %v229 = vld [vmem:[%s138 + $0x178] sm:$0xff]
        %v230 = vld [vmem:[%s138 + $0x180] sm:$0xff]
        %v231 = vld [vmem:[%s138 + $0x188] sm:$0xff]
        %v232 = vld [vmem:[%s138 + $0x190] sm:$0xff]
        %v233 = vld [vmem:[%s138 + $0x198] sm:$0xff]
        %v234 = vld [vmem:[%s138 + $0x1a0] sm:$0xff]
        %v235 = vld [vmem:[%s138 + $0x1a8] sm:$0xff]
        %v236 = vld [vmem:[%s138 + $0x1b0] sm:$0xff]
        %v237 = vld [vmem:[%s138 + $0x1b8] sm:$0xff]
        %v238 = vld [vmem:[%s138 + $0x1c0] sm:$0xff]
        %v239 = vld [vmem:[%s138 + $0x1c8] sm:$0xff]
        %v240 = vld [vmem:[%s138 + $0x1d0] sm:$0xff]
        %v241 = vld [vmem:[%s138 + $0x1d8] sm:$0xff]
        %v242 = vld [vmem:[%s138 + $0x1e0] sm:$0xff]
        %v243 = vld [vmem:[%s138 + $0x1e8] sm:$0xff]
        %v244 = vld [vmem:[%s138 + $0x1f0] sm:$0xff]
        %v245 = vld [vmem:[%s138 + $0x1f8] sm:$0xff]
        %v246 = vld [vmem:[%s138 + $0x200] sm:$0xff]
        %v247 = vld [vmem:[%s138 + $0x208] sm:$0xff]
        %v248 = vld [vmem:[%s138 + $0x210] sm:$0xff]
        %v249 = vld [vmem:[%s138 + $0x218] sm:$0xff]
        %v250 = vld [vmem:[%s138 + $0x220] sm:$0xff]
        %v251 = vld [vmem:[%s138 + $0x228] sm:$0xff]
        %v252 = vld [vmem:[%s138 + $0x230] sm:$0xff]
        %v253 = vld [vmem:[%s138 + $0x238] sm:$0xff]
        %v254 = vld [vmem:[%s138 + $0x240] sm:$0xff]
        %v255 = vld [vmem:[%s138 + $0x248] sm:$0xff]
        %v256 = vld [vmem:[%s138 + $0x250] sm:$0xff]
        %v257 = vld [vmem:[%s138 + $0x258] sm:$0xff]
        %v258 = vld [vmem:[%s138 + $0x260] sm:$0xff]
        %v259 = vld [vmem:[%s138 + $0x268] sm:$0xff]
        %v260 = vld [vmem:[%s138 + $0x270] sm:$0xff]
        %v261 = vld [vmem:[%s138 + $0x278] sm:$0xff]
        %v262 = vld [vmem:[%s138 + $0x280] sm:$0xff]
        %v263 = vld [vmem:[%s138 + $0x288] sm:$0xff]
        %v264 = vld [vmem:[%s138 + $0x290] sm:$0xff]
        %v265 = vld [vmem:[%s138 + $0x298] sm:$0xff]
        %v266 = vld [vmem:[%s138 + $0x2a0] sm:$0xff]
        %v267 = vld [vmem:[%s138 + $0x2a8] sm:$0xff]
        %v268 = vld [vmem:[%s138 + $0x2b0] sm:$0xff]
        %v269 = vld [vmem:[%s138 + $0x2b8] sm:$0xff]
        %v270 = vld [vmem:[%s138 + $0x2c0] sm:$0xff]
        %v271 = vld [vmem:[%s138 + $0x2c8] sm:$0xff]
        %v272 = vld [vmem:[%s138 + $0x2d0] sm:$0xff]
        %v273 = vld [vmem:[%s138 + $0x2d8] sm:$0xff]
        %v274 = vld [vmem:[%s138 + $0x2e0] sm:$0xff]
        %v275 = vld [vmem:[%s138 + $0x2e8] sm:$0xff]
        %v276 = vld [vmem:[%s138 + $0x2f0] sm:$0xff]
        %v277 = vld [vmem:[%s138 + $0x2f8] sm:$0xff]
        %v278 = vld [vmem:[%s138 + $0x300] sm:$0xff]
        %v279 = vld [vmem:[%s138 + $0x308] sm:$0xff]
        %v280 = vld [vmem:[%s138 + $0x310] sm:$0xff]
        %v281 = vld [vmem:[%s138 + $0x318] sm:$0xff]
        %v282 = vld [vmem:[%s138 + $0x320] sm:$0xff]
        %v283 = vld [vmem:[%s138 + $0x328] sm:$0xff]
        %v284 = vld [vmem:[%s138 + $0x330] sm:$0xff]
        %v285 = vld [vmem:[%s138 + $0x338] sm:$0xff]
        %v286 = vld [vmem:[%s138 + $0x340] sm:$0xff]
        %v287 = vld [vmem:[%s138 + $0x348] sm:$0xff]
        %v288 = vld [vmem:[%s138 + $0x350] sm:$0xff]
        %v289 = vld [vmem:[%s138 + $0x358] sm:$0xff]
        %v290 = vld [vmem:[%s138 + $0x360] sm:$0xff]
        %v291 = vld [vmem:[%s138 + $0x368] sm:$0xff]
        %v292 = vld [vmem:[%s138 + $0x370] sm:$0xff]
        %v293 = vld [vmem:[%s138 + $0x378] sm:$0xff]
        %v294 = vld [vmem:[%s138 + $0x380] sm:$0xff]
        %v295 = vld [vmem:[%s138 + $0x388] sm:$0xff]
        %v296 = vld [vmem:[%s138 + $0x390] sm:$0xff]
        %v297 = vld [vmem:[%s138 + $0x398] sm:$0xff]
        %v298 = vld [vmem:[%s138 + $0x3a0] sm:$0xff]
        %v299 = vld [vmem:[%s138 + $0x3a8] sm:$0xff]
        %v300 = vld [vmem:[%s138 + $0x3b0] sm:$0xff]
        %v301 = vld [vmem:[%s138 + $0x3b8] sm:$0xff]
        %v302 = vld [vmem:[%s138 + $0x3c0] sm:$0xff]
        %v303 = vld [vmem:[%s138 + $0x3c8] sm:$0xff]
        %v304 = vld [vmem:[%s138 + $0x3d0] sm:$0xff]
        %v305 = vld [vmem:[%s138 + $0x3d8] sm:$0xff]
        %v306 = vld [vmem:[%s138 + $0x3e0] sm:$0xff]
        %v307 = vld [vmem:[%s138 + $0x3e8] sm:$0xff]
        %v308 = vld [vmem:[%s138 + $0x3f0] sm:$0xff]
        %v309 = vld [vmem:[%s138 + $0x3f8] sm:$0xff]
        %v310 = vld [vmem:[%s138 + $0x400] sm:$0xff]
        %v311 = vld [vmem:[%s138 + $0x408] sm:$0xff]
        %v312 = vld [vmem:[%s138 + $0x410] sm:$0xff]
        %v313 = vld [vmem:[%s138 + $0x418] sm:$0xff]
        %v314 = vld [vmem:[%s138 + $0x420] sm:$0xff]
        %v315 = vld [vmem:[%s138 + $0x428] sm:$0xff]
        %v316 = vld [vmem:[%s138 + $0x430] sm:$0xff]
        %v317 = vld [vmem:[%s138 + $0x438] sm:$0xff]
        %v318 = vld [vmem:[%s138 + $0x440] sm:$0xff]
        %v319 = vld [vmem:[%s138 + $0x448] sm:$0xff]
        %v320 = vld [vmem:[%s138 + $0x450] sm:$0xff]
        %v321 = vld [vmem:[%s138 + $0x458] sm:$0xff]
        %v322 = vld [vmem:[%s138 + $0x460] sm:$0xff]
        %v323 = vld [vmem:[%s138 + $0x468] sm:$0xff]
        %v324 = vld [vmem:[%s138 + $0x470] sm:$0xff]
        %v325 = vld [vmem:[%s138 + $0x478] sm:$0xff]
        %v326 = vld [vmem:[%s138 + $0x480] sm:$0xff]
        %v327 = vld [vmem:[%s138 + $0x488] sm:$0xff]
        %v328 = vld [vmem:[%s138 + $0x490] sm:$0xff]
        %v329 = vld [vmem:[%s138 + $0x498] sm:$0xff]
        %v330 = vld [vmem:[%s138 + $0x4a0] sm:$0xff]
        %v331 = vld [vmem:[%s138 + $0x4a8] sm:$0xff]
        %v332 = vld [vmem:[%s138 + $0x4b0] sm:$0xff]
        %v333 = vld [vmem:[%s138 + $0x4b8] sm:$0xff]
        %v334 = vld [vmem:[%s138 + $0x4c0] sm:$0xff]
        %v335 = vld [vmem:[%s138 + $0x4c8] sm:$0xff]
        %v336 = vld [vmem:[%s138 + $0x4d0] sm:$0xff]
        %v337 = vld [vmem:[%s138 + $0x4d8] sm:$0xff]
        %v338 = vld [vmem:[%s138 + $0x4e0] sm:$0xff]
        %v339 = vld [vmem:[%s138 + $0x4e8] sm:$0xff]
        %v340 = vld [vmem:[%s138 + $0x4f0] sm:$0xff]
        %v341 = vld [vmem:[%s138 + $0x4f8] sm:$0xff]
        %v342 = vld [vmem:[%s138 + $0x500] sm:$0xff]
        %v343 = vld [vmem:[%s138 + $0x508] sm:$0xff]
        %v344 = vld [vmem:[%s138 + $0x510] sm:$0xff]
        %v345 = vld [vmem:[%s138 + $0x518] sm:$0xff]
        %v346 = vld [vmem:[%s138 + $0x520] sm:$0xff]
        %v347 = vld [vmem:[%s138 + $0x528] sm:$0xff]
        %v348 = vld [vmem:[%s138 + $0x530] sm:$0xff]
        %v349 = vld [vmem:[%s138 + $0x538] sm:$0xff]
        %v350 = vld [vmem:[%s138 + $0x540] sm:$0xff]
        %v351 = vld [vmem:[%s138 + $0x548] sm:$0xff]
        %v352 = vld [vmem:[%s138 + $0x550] sm:$0xff]
        %v353 = vld [vmem:[%s138 + $0x558] sm:$0xff]
        %v354 = vld [vmem:[%s138 + $0x560] sm:$0xff]
        %v355 = vld [vmem:[%s138 + $0x568] sm:$0xff]
        %v356 = vld [vmem:[%s138 + $0x570] sm:$0xff]
        %v357 = vld [vmem:[%s138 + $0x578] sm:$0xff]
        %v358 = vld [vmem:[%s138 + $0x580] sm:$0xff]
        %v359 = vld [vmem:[%s138 + $0x588] sm:$0xff]
        %v360 = vld [vmem:[%s138 + $0x590] sm:$0xff]
        %v361 = vld [vmem:[%s138 + $0x598] sm:$0xff]
        %v362 = vld [vmem:[%s138 + $0x5a0] sm:$0xff]
        %v363 = vld [vmem:[%s138 + $0x5a8] sm:$0xff]
        %v364 = vld [vmem:[%s138 + $0x5b0] sm:$0xff]
        %v365 = vld [vmem:[%s138 + $0x5b8] sm:$0xff]
        %v366 = vld [vmem:[%s138 + $0x5c0] sm:$0xff]
        %v367 = vld [vmem:[%s138 + $0x5c8] sm:$0xff]
        %v368 = vld [vmem:[%s138 + $0x5d0] sm:$0xff]
        %v369 = vld [vmem:[%s138 + $0x5d8] sm:$0xff]
        %v370 = vld [vmem:[%s138 + $0x5e0] sm:$0xff]
        %v371 = vld [vmem:[%s138 + $0x5e8] sm:$0xff]
        %v372 = vld [vmem:[%s138 + $0x5f0] sm:$0xff]
        %v373 = vld [vmem:[%s138 + $0x5f8] sm:$0xff]
        %v374 = vld [vmem:[%s138 + $0x600] sm:$0xff]
        %v375 = vld [vmem:[%s138 + $0x608] sm:$0xff]
        %v376 = vld [vmem:[%s138 + $0x610] sm:$0xff]
        %v377 = vld [vmem:[%s138 + $0x618] sm:$0xff]
        %v378 = vld [vmem:[%s138 + $0x620] sm:$0xff]
        %v379 = vld [vmem:[%s138 + $0x628] sm:$0xff]
        %v380 = vld [vmem:[%s138 + $0x630] sm:$0xff]
        %v381 = vld [vmem:[%s138 + $0x638] sm:$0xff]
        %v382 = vld [vmem:[%s138 + $0x640] sm:$0xff]
        %v383 = vld [vmem:[%s138 + $0x648] sm:$0xff]
        %v384 = vld [vmem:[%s138 + $0x650] sm:$0xff]
        %v385 = vld [vmem:[%s138 + $0x658] sm:$0xff]
        %v386 = vld [vmem:[%s138 + $0x660] sm:$0xff]
        %v387 = vld [vmem:[%s138 + $0x668] sm:$0xff]
        %v388 = vld [vmem:[%s138 + $0x670] sm:$0xff]
        %v389 = vld [vmem:[%s138 + $0x678] sm:$0xff]
        %v390 = vld [vmem:[%s138 + $0x680] sm:$0xff]
        %v391 = vld [vmem:[%s138 + $0x688] sm:$0xff]
        %v392 = vld [vmem:[%s138 + $0x690] sm:$0xff]
        %v393 = vld [vmem:[%s138 + $0x698] sm:$0xff]
        %v394 = vld [vmem:[%s138 + $0x6a0] sm:$0xff]
        %v395 = vld [vmem:[%s138 + $0x6a8] sm:$0xff]
        %v396 = vld [vmem:[%s138 + $0x6b0] sm:$0xff]
        %v397 = vld [vmem:[%s138 + $0x6b8] sm:$0xff]
        %v398 = vld [vmem:[%s138 + $0x6c0] sm:$0xff]
        %v399 = vld [vmem:[%s138 + $0x6c8] sm:$0xff]
        %v400 = vld [vmem:[%s138 + $0x6d0] sm:$0xff]
        %v401 = vld [vmem:[%s138 + $0x6d8] sm:$0xff]
        %v402 = vld [vmem:[%s138 + $0x6e0] sm:$0xff]
        %v403 = vld [vmem:[%s138 + $0x6e8] sm:$0xff]
        %v404 = vld [vmem:[%s138 + $0x6f0] sm:$0xff]
        %v405 = vld [vmem:[%s138 + $0x6f8] sm:$0xff]
        %v406 = vld [vmem:[%s138 + $0x700] sm:$0xff]
        %v407 = vld [vmem:[%s138 + $0x708] sm:$0xff]
        %v408 = vld [vmem:[%s138 + $0x710] sm:$0xff]
        %v409 = vld [vmem:[%s138 + $0x718] sm:$0xff]
        %v410 = vld [vmem:[%s138 + $0x720] sm:$0xff]
        %v411 = vld [vmem:[%s138 + $0x728] sm:$0xff]
        %v412 = vld [vmem:[%s138 + $0x730] sm:$0xff]
        %v413 = vld [vmem:[%s138 + $0x738] sm:$0xff]
        %v414 = vld [vmem:[%s138 + $0x740] sm:$0xff]
        %v415 = vld [vmem:[%s138 + $0x748] sm:$0xff]
        %v416 = vld [vmem:[%s138 + $0x750] sm:$0xff]
        %v417 = vld [vmem:[%s138 + $0x758] sm:$0xff]
        %v418 = vld [vmem:[%s138 + $0x760] sm:$0xff]
        %v419 = vld [vmem:[%s138 + $0x768] sm:$0xff]
        %v420 = vld [vmem:[%s138 + $0x770] sm:$0xff]
        %v421 = vld [vmem:[%s138 + $0x778] sm:$0xff]
        %v422 = vld [vmem:[%s138 + $0x780] sm:$0xff]
        %v423 = vld [vmem:[%s138 + $0x788] sm:$0xff]
        %v424 = vld [vmem:[%s138 + $0x790] sm:$0xff]
        %v425 = vld [vmem:[%s138 + $0x798] sm:$0xff]
        %v426 = vld [vmem:[%s138 + $0x7a0] sm:$0xff]
        %v427 = vld [vmem:[%s138 + $0x7a8] sm:$0xff]
        %v428 = vld [vmem:[%s138 + $0x7b0] sm:$0xff]
        %v429 = vld [vmem:[%s138 + $0x7b8] sm:$0xff]
        %v430 = vld [vmem:[%s138 + $0x7c0] sm:$0xff]
        %v431 = vld [vmem:[%s138 + $0x7c8] sm:$0xff]
        %v432 = vld [vmem:[%s138 + $0x7d0] sm:$0xff]
        %v433 = vld [vmem:[%s138 + $0x7d8] sm:$0xff]
        %v434 = vld [vmem:[%s138 + $0x7e0] sm:$0xff]
        %v435 = vld [vmem:[%s138 + $0x7e8] sm:$0xff]
        %v436 = vld [vmem:[%s138 + $0x7f0] sm:$0xff]
        %v437 = vld [vmem:[%s138 + $0x7f8] sm:$0xff]
        %438 = vmatprep.subr.mxu0 %v183
        %439 = vmatpush1.msra.mxu0 %v182
        %440 = vmatprep.subr.mxu0 %v185
        %441 = vmatpush1.msra.mxu0 %v184
        %442 = vmatprep.subr.mxu0 %v187
        %443 = vmatpush1.msra.mxu0 %v186
        %444 = vmatprep.subr.mxu0 %v189
        %445 = vmatpush1.msra.mxu0 %v188
        %446 = vmatprep.subr.mxu0 %v191
        %447 = vmatpush1.msra.mxu0 %v190
        %448 = vmatprep.subr.mxu0 %v193
        %449 = vmatpush1.msra.mxu0 %v192
        %450 = vmatprep.subr.mxu0 %v195
        %451 = vmatpush1.msra.mxu0 %v194
        %452 = vmatprep.subr.mxu0 %v197
        %453 = vmatpush1.msra.mxu0 %v196
        %454 = vmatprep.subr.mxu0 %v199
        %455 = vmatpush1.msra.mxu0 %v198
        %456 = vmatprep.subr.mxu0 %v201
        %457 = vmatpush1.msra.mxu0 %v200
        %458 = vmatprep.subr.mxu0 %v203
        %459 = vmatpush1.msra.mxu0 %v202
        %460 = vmatprep.subr.mxu0 %v205
        %461 = vmatpush1.msra.mxu0 %v204
        %462 = vmatprep.subr.mxu0 %v207
        %463 = vmatpush1.msra.mxu0 %v206
        %464 = vmatprep.subr.mxu0 %v209
        %465 = vmatpush1.msra.mxu0 %v208
        %466 = vmatprep.subr.mxu0 %v211
        %467 = vmatpush1.msra.mxu0 %v210
        %468 = vmatprep.subr.mxu0 %v213
        %469 = vmatpush1.msra.mxu0 %v212
        %470 = vmatprep.subr.mxu0 %v215
        %471 = vmatpush1.msra.mxu0 %v214
        %472 = vmatprep.subr.mxu0 %v217
        %473 = vmatpush1.msra.mxu0 %v216
        %474 = vmatprep.subr.mxu0 %v219
        %475 = vmatpush1.msra.mxu0 %v218
        %476 = vmatprep.subr.mxu0 %v221
        %477 = vmatpush1.msra.mxu0 %v220
        %478 = vmatprep.subr.mxu0 %v223
        %479 = vmatpush1.msra.mxu0 %v222
        %480 = vmatprep.subr.mxu0 %v225
        %481 = vmatpush1.msra.mxu0 %v224
        %482 = vmatprep.subr.mxu0 %v227
        %483 = vmatpush1.msra.mxu0 %v226
        %484 = vmatprep.subr.mxu0 %v229
        %485 = vmatpush1.msra.mxu0 %v228
        %486 = vmatprep.subr.mxu0 %v231
        %487 = vmatpush1.msra.mxu0 %v230
        %488 = vmatprep.subr.mxu0 %v233
        %489 = vmatpush1.msra.mxu0 %v232
        %490 = vmatprep.subr.mxu0 %v235
        %491 = vmatpush1.msra.mxu0 %v234
        %492 = vmatprep.subr.mxu0 %v237
        %493 = vmatpush1.msra.mxu0 %v236
        %494 = vmatprep.subr.mxu0 %v239
        %495 = vmatpush1.msra.mxu0 %v238
        %496 = vmatprep.subr.mxu0 %v241
        %497 = vmatpush1.msra.mxu0 %v240
        %498 = vmatprep.subr.mxu0 %v243
        %499 = vmatpush1.msra.mxu0 %v242
        %500 = vmatprep.subr.mxu0 %v245
        %501 = vmatpush1.msra.mxu0 %v244
        %502 = vmatprep.mubr.f32.mxu0 %v167
        %503 = vmatmul.mubr.f32.gmra.mrb[0].mxu0 %v166
        %v504 = vpop.f32.mrb[0].mxu0
        %v505 = vadd.f32 0.0, %v504
        %v506 = vpop.f32.mrb[0].mxu0
        %v507 = vadd.f32 0.0, %v506
        %508 = vmatprep.mubr.f32.mxu0 %v175
        %509 = vmatmul.mubr.f32.gmra.mrb[0].mxu0 %v174
        %v510 = vpop.f32.mrb[0].mxu0
        %v511 = vadd.f32 0.0, %v510
        %v512 = vpop.f32.mrb[0].mxu0
        %v513 = vadd.f32 0.0, %v512
        %514 = vdwg.mxu0
        %515 = vmatprep.subr.mxu0 %v247
        %516 = vmatpush1.msra.mxu0 %v246
        %517 = vmatprep.subr.mxu0 %v249
        %518 = vmatpush1.msra.mxu0 %v248
        %519 = vmatprep.subr.mxu0 %v251
        %520 = vmatpush1.msra.mxu0 %v250
        %521 = vmatprep.subr.mxu0 %v253
        %522 = vmatpush1.msra.mxu0 %v252
        %523 = vmatprep.subr.mxu0 %v255
        %524 = vmatpush1.msra.mxu0 %v254
        %525 = vmatprep.subr.mxu0 %v257
        %526 = vmatpush1.msra.mxu0 %v256
        %527 = vmatprep.subr.mxu0 %v259
        %528 = vmatpush1.msra.mxu0 %v258
        %529 = vmatprep.subr.mxu0 %v261
        %530 = vmatpush1.msra.mxu0 %v260
        %531 = vmatprep.subr.mxu0 %v263
        %532 = vmatpush1.msra.mxu0 %v262
        %533 = vmatprep.subr.mxu0 %v265
        %534 = vmatpush1.msra.mxu0 %v264
        %535 = vmatprep.subr.mxu0 %v267
        %536 = vmatpush1.msra.mxu0 %v266
        %537 = vmatprep.subr.mxu0 %v269
        %538 = vmatpush1.msra.mxu0 %v268
        %539 = vmatprep.subr.mxu0 %v271
        %540 = vmatpush1.msra.mxu0 %v270
        %541 = vmatprep.subr.mxu0 %v273
        %542 = vmatpush1.msra.mxu0 %v272
        %543 = vmatprep.subr.mxu0 %v275
        %544 = vmatpush1.msra.mxu0 %v274
        %545 = vmatprep.subr.mxu0 %v277
        %546 = vmatpush1.msra.mxu0 %v276
        %547 = vmatprep.subr.mxu0 %v279
        %548 = vmatpush1.msra.mxu0 %v278
        %549 = vmatprep.subr.mxu0 %v281
        %550 = vmatpush1.msra.mxu0 %v280
        %551 = vmatprep.subr.mxu0 %v283
        %552 = vmatpush1.msra.mxu0 %v282
        %553 = vmatprep.subr.mxu0 %v285
        %554 = vmatpush1.msra.mxu0 %v284
        %555 = vmatprep.subr.mxu0 %v287
        %556 = vmatpush1.msra.mxu0 %v286
        %557 = vmatprep.subr.mxu0 %v289
        %558 = vmatpush1.msra.mxu0 %v288
        %559 = vmatprep.subr.mxu0 %v291
        %560 = vmatpush1.msra.mxu0 %v290
        %561 = vmatprep.subr.mxu0 %v293
        %562 = vmatpush1.msra.mxu0 %v292
        %563 = vmatprep.subr.mxu0 %v295
        %564 = vmatpush1.msra.mxu0 %v294
        %565 = vmatprep.subr.mxu0 %v297
        %566 = vmatpush1.msra.mxu0 %v296
        %567 = vmatprep.subr.mxu0 %v299
        %568 = vmatpush1.msra.mxu0 %v298
        %569 = vmatprep.subr.mxu0 %v301
        %570 = vmatpush1.msra.mxu0 %v300
        %571 = vmatprep.subr.mxu0 %v303
        %572 = vmatpush1.msra.mxu0 %v302
        %573 = vmatprep.subr.mxu0 %v305
        %574 = vmatpush1.msra.mxu0 %v304
        %575 = vmatprep.subr.mxu0 %v307
        %576 = vmatpush1.msra.mxu0 %v306
        %577 = vmatprep.subr.mxu0 %v309
        %578 = vmatpush1.msra.mxu0 %v308
        %579 = vmatprep.mubr.f32.mxu0 %v169
        %580 = vmatmul.mubr.f32.gmra.mrb[0].mxu0 %v168
        %v581 = vpop.f32.mrb[0].mxu0
        %v582 = vadd.f32 %v505, %v581
        %v583 = vpop.f32.mrb[0].mxu0
        %v584 = vadd.f32 %v507, %v583
        %585 = vmatprep.mubr.f32.mxu0 %v177
        %586 = vmatmul.mubr.f32.gmra.mrb[0].mxu0 %v176
        %v587 = vpop.f32.mrb[0].mxu0
        %v588 = vadd.f32 %v511, %v587
        %v589 = vpop.f32.mrb[0].mxu0
        %v590 = vadd.f32 %v513, %v589
        %591 = vdwg.mxu0
        %592 = vmatprep.subr.mxu0 %v311
        %593 = vmatpush1.msra.mxu0 %v310
        %594 = vmatprep.subr.mxu0 %v313
        %595 = vmatpush1.msra.mxu0 %v312
        %596 = vmatprep.subr.mxu0 %v315
        %597 = vmatpush1.msra.mxu0 %v314
        %598 = vmatprep.subr.mxu0 %v317
        %599 = vmatpush1.msra.mxu0 %v316
        %600 = vmatprep.subr.mxu0 %v319
        %601 = vmatpush1.msra.mxu0 %v318
        %602 = vmatprep.subr.mxu0 %v321
        %603 = vmatpush1.msra.mxu0 %v320
        %604 = vmatprep.subr.mxu0 %v323
        %605 = vmatpush1.msra.mxu0 %v322
        %606 = vmatprep.subr.mxu0 %v325
        %607 = vmatpush1.msra.mxu0 %v324
        %608 = vmatprep.subr.mxu0 %v327
        %609 = vmatpush1.msra.mxu0 %v326
        %610 = vmatprep.subr.mxu0 %v329
        %611 = vmatpush1.msra.mxu0 %v328
        %612 = vmatprep.subr.mxu0 %v331
        %613 = vmatpush1.msra.mxu0 %v330
        %614 = vmatprep.subr.mxu0 %v333
        %615 = vmatpush1.msra.mxu0 %v332
        %616 = vmatprep.subr.mxu0 %v335
        %617 = vmatpush1.msra.mxu0 %v334
        %618 = vmatprep.subr.mxu0 %v337
        %619 = vmatpush1.msra.mxu0 %v336
        %620 = vmatprep.subr.mxu0 %v339
        %621 = vmatpush1.msra.mxu0 %v338
        %622 = vmatprep.subr.mxu0 %v341
        %623 = vmatpush1.msra.mxu0 %v340
        %624 = vmatprep.subr.mxu0 %v343
        %625 = vmatpush1.msra.mxu0 %v342
        %626 = vmatprep.subr.mxu0 %v345
        %627 = vmatpush1.msra.mxu0 %v344
        %628 = vmatprep.subr.mxu0 %v347
        %629 = vmatpush1.msra.mxu0 %v346
        %630 = vmatprep.subr.mxu0 %v349
        %631 = vmatpush1.msra.mxu0 %v348
        %632 = vmatprep.subr.mxu0 %v351
        %633 = vmatpush1.msra.mxu0 %v350
        %634 = vmatprep.subr.mxu0 %v353
        %635 = vmatpush1.msra.mxu0 %v352
        %636 = vmatprep.subr.mxu0 %v355
        %637 = vmatpush1.msra.mxu0 %v354
        %638 = vmatprep.subr.mxu0 %v357
        %639 = vmatpush1.msra.mxu0 %v356
        %640 = vmatprep.subr.mxu0 %v359
        %641 = vmatpush1.msra.mxu0 %v358
        %642 = vmatprep.subr.mxu0 %v361
        %643 = vmatpush1.msra.mxu0 %v360
        %644 = vmatprep.subr.mxu0 %v363
        %645 = vmatpush1.msra.mxu0 %v362
        %646 = vmatprep.subr.mxu0 %v365
        %647 = vmatpush1.msra.mxu0 %v364
        %648 = vmatprep.subr.mxu0 %v367
        %649 = vmatpush1.msra.mxu0 %v366
        %650 = vmatprep.subr.mxu0 %v369
        %651 = vmatpush1.msra.mxu0 %v368
        %652 = vmatprep.subr.mxu0 %v371
        %653 = vmatpush1.msra.mxu0 %v370
        %654 = vmatprep.subr.mxu0 %v373
        %655 = vmatpush1.msra.mxu0 %v372
        %656 = vmatprep.mubr.f32.mxu0 %v171
        %657 = vmatmul.mubr.f32.gmra.mrb[0].mxu0 %v170
        %v658 = vpop.f32.mrb[0].mxu0
        %v659 = vadd.f32 %v582, %v658
        %v660 = vpop.f32.mrb[0].mxu0
        %v661 = vadd.f32 %v584, %v660
        %662 = vmatprep.mubr.f32.mxu0 %v179
        %663 = vmatmul.mubr.f32.gmra.mrb[0].mxu0 %v178
        %v664 = vpop.f32.mrb[0].mxu0
        %v665 = vadd.f32 %v588, %v664
        %v666 = vpop.f32.mrb[0].mxu0
        %v667 = vadd.f32 %v590, %v666
        %668 = vdwg.mxu0
        %669 = vmatprep.subr.mxu0 %v375
        %670 = vmatpush1.msra.mxu0 %v374
        %671 = vmatprep.subr.mxu0 %v377
        %672 = vmatpush1.msra.mxu0 %v376
        %673 = vmatprep.subr.mxu0 %v379
        %674 = vmatpush1.msra.mxu0 %v378
        %675 = vmatprep.subr.mxu0 %v381
        %676 = vmatpush1.msra.mxu0 %v380
        %677 = vmatprep.subr.mxu0 %v383
        %678 = vmatpush1.msra.mxu0 %v382
        %679 = vmatprep.subr.mxu0 %v385
        %680 = vmatpush1.msra.mxu0 %v384
        %681 = vmatprep.subr.mxu0 %v387
        %682 = vmatpush1.msra.mxu0 %v386
        %683 = vmatprep.subr.mxu0 %v389
        %684 = vmatpush1.msra.mxu0 %v388
        %685 = vmatprep.subr.mxu0 %v391
        %686 = vmatpush1.msra.mxu0 %v390
        %687 = vmatprep.subr.mxu0 %v393
        %688 = vmatpush1.msra.mxu0 %v392
        %689 = vmatprep.subr.mxu0 %v395
        %690 = vmatpush1.msra.mxu0 %v394
        %691 = vmatprep.subr.mxu0 %v397
        %692 = vmatpush1.msra.mxu0 %v396
        %693 = vmatprep.subr.mxu0 %v399
        %694 = vmatpush1.msra.mxu0 %v398
        %695 = vmatprep.subr.mxu0 %v401
        %696 = vmatpush1.msra.mxu0 %v400
        %697 = vmatprep.subr.mxu0 %v403
        %698 = vmatpush1.msra.mxu0 %v402
        %699 = vmatprep.subr.mxu0 %v405
        %700 = vmatpush1.msra.mxu0 %v404
        %701 = vmatprep.subr.mxu0 %v407
        %702 = vmatpush1.msra.mxu0 %v406
        %703 = vmatprep.subr.mxu0 %v409
        %704 = vmatpush1.msra.mxu0 %v408
        %705 = vmatprep.subr.mxu0 %v411
        %706 = vmatpush1.msra.mxu0 %v410
        %707 = vmatprep.subr.mxu0 %v413
        %708 = vmatpush1.msra.mxu0 %v412
        %709 = vmatprep.subr.mxu0 %v415
        %710 = vmatpush1.msra.mxu0 %v414
        %711 = vmatprep.subr.mxu0 %v417
        %712 = vmatpush1.msra.mxu0 %v416
        %713 = vmatprep.subr.mxu0 %v419
        %714 = vmatpush1.msra.mxu0 %v418
        %715 = vmatprep.subr.mxu0 %v421
        %716 = vmatpush1.msra.mxu0 %v420
        %717 = vmatprep.subr.mxu0 %v423
        %718 = vmatpush1.msra.mxu0 %v422
        %719 = vmatprep.subr.mxu0 %v425
        %720 = vmatpush1.msra.mxu0 %v424
        %721 = vmatprep.subr.mxu0 %v427
        %722 = vmatpush1.msra.mxu0 %v426
        %723 = vmatprep.subr.mxu0 %v429
        %724 = vmatpush1.msra.mxu0 %v428
        %725 = vmatprep.subr.mxu0 %v431
        %726 = vmatpush1.msra.mxu0 %v430
        %727 = vmatprep.subr.mxu0 %v433
        %728 = vmatpush1.msra.mxu0 %v432
        %729 = vmatprep.subr.mxu0 %v435
        %730 = vmatpush1.msra.mxu0 %v434
        %731 = vmatprep.subr.mxu0 %v437
        %732 = vmatpush1.msra.mxu0 %v436
        %733 = vmatprep.mubr.f32.mxu0 %v173
        %734 = vmatmul.mubr.f32.gmra.mrb[0].mxu0 %v172
        %v735 = vpop.f32.mrb[0].mxu0
        %v736 = vadd.f32 %v659, %v735
        %v737 = vpop.f32.mrb[0].mxu0
        %v738 = vadd.f32 %v661, %v737
        %739 = vmatprep.mubr.f32.mxu0 %v181
        %740 = vmatmul.mubr.f32.gmra.mrb[0].mxu0 %v180
        %v741 = vpop.f32.mrb[0].mxu0
        %v742 = vadd.f32 %v665, %v741
        %v743 = vpop.f32.mrb[0].mxu0
        %v744 = vadd.f32 %v667, %v743
        %745 = vdwg.mxu0
        %v746 = vmul.f32 %v736, %v736
        %v747 = vmul.f32 %v738, %v738
        %v748 = vsub.f32 %v742, %v746
        %v749 = vsub.f32 %v744, %v747
        %750 = vst [vmem:[%s164] sm:$0xff] %v748
        %751 = vst [vmem:[%s164 + $0x8] sm:$0xff] %v749
        %s752 = smul.u32 2, %s16
        %p753 = scmp.lt.s32.totalorder %s752, 3
        %s754 = scalar_select %p753, %s752, 3
        %s755 = smul.addr %s754, 8
        %s756 = scalar_lea.vmem %s2, %s755
        // Predicated region
        $region33: #{contrast_extracter_forward.1} parent=27 // pred_check
          %p757 = pneg %p81
        $region34: #{contrast_extracter_forward.1} parent=27 // pred_check_branch
          %759 = sbr.rel (%p757) target = $region36
        $region35: #{contrast_extracter_forward.1} parent=27 // pred_region
          %s760 = smul.u32 2, %s16
        $region36: #{contrast_extracter_forward.1} parent=27 // pred_fallthru
          _
      $region28: #{contrast_extracter_forward.1} parent=5 // pred_fallthru
        _
      %p761 = scmp.le.s32.totalorder 2, %s11
      // Predicated region
      $region37: #{contrast_extracter_forward.1} parent=5 // pred_check
        %p762 = pneg %p761
      $region38: #{contrast_extracter_forward.1} parent=5 // pred_check_branch
        %764 = sbr.rel (%p762) target = $region40
      $region39: #{contrast_extracter_forward.1} parent=5 // pred_region
        %s765 = ssub.s32 %s11, 2
        // Predicated region
        $region41: #{contrast_extracter_forward.1} parent=39 // pred_check
          %p766 = pneg %p87
        $region42: #{contrast_extracter_forward.1} parent=39 // pred_check_branch
          %768 = sbr.rel (%p766) target = $region44
        $region43: #{contrast_extracter_forward.1} parent=39 // pred_region
          %s769 = smul.u32 2, %s17
          %p770 = scmp.lt.s32.totalorder %s769, 3
          %s771 = scalar_select %p770, %s769, 3
          %s772 = smul.addr %s771, 8
          %s773 = scalar_lea.vmem %s2, %s772
        $region44: #{contrast_extracter_forward.1} parent=39 // pred_fallthru
          _
      $region40: #{contrast_extracter_forward.1} parent=5 // pred_fallthru
        _
    $region6: #{contrast_extracter_forward.1} parent=1 // loop_footer
      %s15 = sadd.s32 1, %s11
    $region7: #{contrast_extracter_forward.1} parent=1 // loop_footer_branch
      %10 = sbr.rel target = $region3
    $region8: #{contrast_extracter_forward.1} parent=1 // loop_exit
      _
    %774 = vsyncpa [#allocation3], 1
    %s775 = scalar_lea.sflag [#allocation3], 1
    %776 = vsyncpa %s775, 1

</llo_original>
